<compile_context>
chip_gen: v6e
topology: v6e:2x2x1
jax: 0.10.0
libtpu: 0.0.40
codegen_flags: <defaults>
</compile_context>

<pallas_src>
import functools
import math

import jax
import jax.numpy as jnp
from jax.experimental import pallas as pl
from jax.experimental.pallas import tpu as pltpu


def encoder_layer_kernel(src_ref, wqkv_ref, bqkv_ref, wo_ref, bo_ref, out_ref,
                         *, num_heads):
    """Whole layer fused in one kernel (small shapes -> everything VMEM resident).

    src_ref: (L, N, E) f32    wqkv: (E, 3E) bf16    bqkv: (1, 3E) f32
    wo: (E, E) bf16           bo: (1, E) f32        out_ref: (L, N, E) f32
    """
    x = src_ref[...].astype(jnp.float32)              # (L, N, E), native layout
    L, N, E = x.shape
    H = num_heads
    Dh = E // H
    M = N * L

    # Batch-major once, inside VMEM (no HBM transpose pass), then collapse (N, L)
    # into a single M dimension for the dense projections.
    xt = pltpu.einshape("lne->nle", x)                # (N, L, E) f32
    x2d = xt.reshape(M, E)                            # rows = (n, l), f32 (residual)

    # --- fused QKV projection: one 2-D bf16 MXU matmul, f32 accumulation ---
    qkv = jnp.dot(x2d.astype(jnp.bfloat16), wqkv_ref[...],
                  preferred_element_type=jnp.float32) + bqkv_ref[...]   # (M, 3E) f32

    # --- head-batched q/k/v: (H*N, L, Dh), batch index b = h*N + n ---
    # 8-lane aligned slices + a leading-axis stack; cheap layout plumbing that keeps
    # the heavy work (scores / softmax / PV / out-proj) as single batched ops.
    def to_batched(base):
        parts = [qkv[:, base + h * Dh: base + (h + 1) * Dh] for h in range(H)]
        b = jnp.stack(parts, axis=0)                  # (H, M, Dh) f32
        return b.reshape(H * N, L, Dh).astype(jnp.bfloat16)

    q_b = to_batched(0)                               # scale pre-folded into Wq/bq
    k_b = to_batched(E)
    v_b = to_batched(2 * E)

    # --- ONE batched score matmul + ONE softmax + ONE PV matmul ---
    s = jnp.einsum('bld,bmd->blm', q_b, k_b,
                   preferred_element_type=jnp.float32)        # (H*N, L, L) f32
    s = s - jnp.max(s, axis=-1, keepdims=True)
    p = jnp.exp(s)                                            # f32 softmax math
    p = p * pl.reciprocal(jnp.sum(p, axis=-1, keepdims=True), approx=True)
    o_b = jnp.einsum('blm,bmd->bld', p.astype(jnp.bfloat16), v_b,
                     preferred_element_type=jnp.float32)      # (H*N, L, Dh) f32

    # --- merge heads -> (M, E), SINGLE output projection over full E ---
    o4 = o_b.reshape(H, N, L, Dh)                             # leading split only
    o_nle = jnp.concatenate([o4[h] for h in range(H)], axis=-1)   # (N, L, E)
    attn = jnp.dot(o_nle.reshape(M, E).astype(jnp.bfloat16), wo_ref[...],
                   preferred_element_type=jnp.float32) + bo_ref[...]  # (M, E) f32

    # --- residual (pre-projection src), InstanceNorm1d over L, ReLU ---
    y = (x2d + attn).reshape(N, L, E)                 # f32
    mean = jnp.mean(y, axis=1, keepdims=True)         # over L per (n, e)
    var = jnp.mean(jnp.square(y - mean), axis=1, keepdims=True)
    y = (y - mean) * jax.lax.rsqrt(var + 1e-5)
    y = jnp.maximum(y, 0.0)

    # Back to the module's (L, N, E) layout; one full-tile store.
    # TODO(synk): for real N/E, present a lane-dense (rows, 128k) slab instead of a
    # last-dim-32 tile to avoid masked vst.msk partial stores.
    out_ref[...] = pltpu.einshape("nle->lne", y).astype(out_ref.dtype)


def transformer_encoder_layer(src, params, num_heads):
    """src: (L, N, E) float32 -> (L, N, E) float32.  No host-side activation transposes."""
    L, N, E = src.shape
    head_dim = E // num_heads
    scale = 1.0 / math.sqrt(head_dim)

    # Fuse QKV, fold the attention scale into the query projection, and cast the
    # matmul weights to bf16.  Weight-only ops: constant-folded / hoisted under jit.
    wqkv = jnp.concatenate([params['wq'] * scale, params['wk'], params['wv']],
                           axis=1).astype(jnp.bfloat16)          # (E, 3E) bf16
    bqkv = jnp.concatenate([params['bq'] * scale, params['bk'], params['bv']],
                           axis=1)                               # (1, 3E) f32
    wo = params['wo'].astype(jnp.bfloat16)                       # (E, E) bf16

    kernel = functools.partial(encoder_layer_kernel, num_heads=num_heads)
    vmem = pl.BlockSpec(memory_space=pltpu.MemorySpace.VMEM)

    # TODO(synk): at production N add grid=(N,) (batch-major blocks) with
    # dimension_semantics=("parallel",) for v7x's 2 TensorCores, and recompute
    # vmem_limit_bytes from actual block sizes once KV blocking is added.
    return pl.pallas_call(
        kernel,
        out_shape=jax.ShapeDtypeStruct((L, N, E), src.dtype),
        in_specs=[vmem] * 5,
        out_specs=vmem,
    )(src, wqkv, bqkv, wo, params['bo'])


def make_params(key, d_model):
    ks = jax.random.split(key, 8)
    init = lambda k, shape: (0.02 * jax.random.normal(k, shape)).astype(jnp.float32)
    return {
        'wq': init(ks[0], (d_model, d_model)), 'bq': init(ks[1], (1, d_model)),
        'wk': init(ks[2], (d_model, d_model)), 'bk': init(ks[3], (1, d_model)),
        'wv': init(ks[4], (d_model, d_model)), 'bv': init(ks[5], (1, d_model)),
        'wo': init(ks[6], (d_model, d_model)), 'bo': init(ks[7], (1, d_model)),
    }


def reference_forward(src, params, num_heads):
    """Pure-JAX f32 reference of the same forward (unfused weights, exact softmax)."""
    L, N, E = src.shape
    Dh = E // num_heads
    x = jnp.transpose(src, (1, 0, 2)).astype(jnp.float32)          # (N, L, E)
    q = x @ params['wq'] + params['bq']
    k = x @ params['wk'] + params['bk']
    v = x @ params['wv'] + params['bv']
    outs = []
    for h in range(num_heads):
        sl = slice(h * Dh, (h + 1) * Dh)
        s = jnp.einsum('nld,nmd->nlm', q[..., sl], k[..., sl]) / math.sqrt(Dh)
        p = jax.nn.softmax(s, axis=-1)
        outs.append(jnp.einsum('nlm,nmd->nld', p, v[..., sl]))
    attn = jnp.concatenate(outs, axis=-1) @ params['wo'] + params['bo']
    y = x + attn
    mean = jnp.mean(y, axis=1, keepdims=True)
    var = jnp.mean((y - mean) ** 2, axis=1, keepdims=True)
    y = (y - mean) / jnp.sqrt(var + 1e-5)
    y = jnp.maximum(y, 0.0)
    return jnp.transpose(y, (1, 0, 2))                             # (L, N, E)


if __name__ == "__main__":
    # Small shapes consistent with the module's forward: src is (L, N, E).
    L, N, E, H = 8, 2, 32, 4

    key = jax.random.PRNGKey(0)
    k_src, k_par = jax.random.split(key)
    src = jax.random.normal(k_src, (L, N, E), dtype=jnp.float32)
    params = make_params(k_par, E)

    out = jax.block_until_ready(transformer_encoder_layer(src, params, num_heads=H))
    ref = jax.block_until_ready(reference_forward(src, params, num_heads=H))

    assert out.shape == (L, N, E)
    assert bool(jnp.all(out >= 0.0))                     # ReLU output
    assert bool(jnp.all(jnp.isfinite(out)))
    # bf16 MXU inputs + approx reciprocal vs. exact f32 reference.
    assert float(jnp.max(jnp.abs(out - ref))) < 1e-2
    print("KERNEL_OK")
</pallas_src>

<mosaic_0001>
module attributes {stable_mosaic.version = 11 : i64} {
  func.func @encoder_layer_kernel(%arg0: memref<8x2x32xf32, #tpu.memory_space<vmem>>, %arg1: memref<32x96xbf16, #tpu.memory_space<vmem>>, %arg2: memref<1x96xf32, #tpu.memory_space<vmem>>, %arg3: memref<32x32xbf16, #tpu.memory_space<vmem>>, %arg4: memref<1x32xf32, #tpu.memory_space<vmem>>, %arg5: memref<8x2x32xf32, #tpu.memory_space<vmem>>) attributes {dimension_semantics = [], scalar_prefetch = 0 : i64, scratch_operands = 0 : i64, tpu.core_type = #tpu.core_type<tc>} {
    %c0 = arith.constant 0 : index
    %c0_0 = arith.constant 0 : index
    %c0_1 = arith.constant 0 : index
    %0 = vector.load %arg0[%c0, %c0_0, %c0_1] : memref<8x2x32xf32, #tpu.memory_space<vmem>>, vector<8x2x32xf32>
    %1 = tpu.transpose %0, [1, 0, 2] : vector<8x2x32xf32> -> vector<2x8x32xf32>
    %2 = vector.shape_cast %1 : vector<2x8x32xf32> to vector<16x32xf32>
    %3 = arith.truncf %2 : vector<16x32xf32> to vector<16x32xbf16>
    %c0_2 = arith.constant 0 : index
    %c0_3 = arith.constant 0 : index
    %4 = vector.load %arg1[%c0_2, %c0_3] : memref<32x96xbf16, #tpu.memory_space<vmem>>, vector<32x96xbf16>
    %cst = arith.constant dense<0.000000e+00> : vector<16x96xf32>
    %5 = tpu.matmul %3, %4, %cst {dimension_numbers = #tpu.dot_dimension_numbers<[1], [0], [0], [1], [0, 0, 1, 1], [], []>} : vector<16x32xbf16>, vector<32x96xbf16>, vector<16x96xf32> -> vector<16x96xf32>
    %c0_4 = arith.constant 0 : index
    %c0_5 = arith.constant 0 : index
    %6 = vector.load %arg2[%c0_4, %c0_5] : memref<1x96xf32, #tpu.memory_space<vmem>>, vector<1x96xf32>
    %7 = vector.broadcast %6 : vector<1x96xf32> to vector<16x96xf32>
    %8 = arith.addf %5, %7 : vector<16x96xf32>
    %9 = vector.extract_strided_slice %8 {offsets = [0, 0], sizes = [16, 8], strides = [1, 1]} : vector<16x96xf32> to vector<16x8xf32>
    %10 = vector.extract_strided_slice %8 {offsets = [0, 8], sizes = [16, 8], strides = [1, 1]} : vector<16x96xf32> to vector<16x8xf32>
    %11 = vector.extract_strided_slice %8 {offsets = [0, 16], sizes = [16, 8], strides = [1, 1]} : vector<16x96xf32> to vector<16x8xf32>
    %12 = vector.extract_strided_slice %8 {offsets = [0, 24], sizes = [16, 8], strides = [1, 1]} : vector<16x96xf32> to vector<16x8xf32>
    %13 = vector.shape_cast %9 : vector<16x8xf32> to vector<1x16x8xf32>
    %14 = vector.shape_cast %10 : vector<16x8xf32> to vector<1x16x8xf32>
    %15 = vector.shape_cast %11 : vector<16x8xf32> to vector<1x16x8xf32>
    %16 = vector.shape_cast %12 : vector<16x8xf32> to vector<1x16x8xf32>
    %17 = tpu.concatenate %13, %14, %15, %16 in 0 : vector<1x16x8xf32>, vector<1x16x8xf32>, vector<1x16x8xf32>, vector<1x16x8xf32> -> vector<4x16x8xf32>
    %18 = vector.shape_cast %17 : vector<4x16x8xf32> to vector<8x8x8xf32>
    %19 = arith.truncf %18 : vector<8x8x8xf32> to vector<8x8x8xbf16>
    %20 = vector.extract_strided_slice %8 {offsets = [0, 32], sizes = [16, 8], strides = [1, 1]} : vector<16x96xf32> to vector<16x8xf32>
    %21 = vector.extract_strided_slice %8 {offsets = [0, 40], sizes = [16, 8], strides = [1, 1]} : vector<16x96xf32> to vector<16x8xf32>
    %22 = vector.extract_strided_slice %8 {offsets = [0, 48], sizes = [16, 8], strides = [1, 1]} : vector<16x96xf32> to vector<16x8xf32>
    %23 = vector.extract_strided_slice %8 {offsets = [0, 56], sizes = [16, 8], strides = [1, 1]} : vector<16x96xf32> to vector<16x8xf32>
    %24 = vector.shape_cast %20 : vector<16x8xf32> to vector<1x16x8xf32>
    %25 = vector.shape_cast %21 : vector<16x8xf32> to vector<1x16x8xf32>
    %26 = vector.shape_cast %22 : vector<16x8xf32> to vector<1x16x8xf32>
    %27 = vector.shape_cast %23 : vector<16x8xf32> to vector<1x16x8xf32>
    %28 = tpu.concatenate %24, %25, %26, %27 in 0 : vector<1x16x8xf32>, vector<1x16x8xf32>, vector<1x16x8xf32>, vector<1x16x8xf32> -> vector<4x16x8xf32>
    %29 = vector.shape_cast %28 : vector<4x16x8xf32> to vector<8x8x8xf32>
    %30 = arith.truncf %29 : vector<8x8x8xf32> to vector<8x8x8xbf16>
    %31 = vector.extract_strided_slice %8 {offsets = [0, 64], sizes = [16, 8], strides = [1, 1]} : vector<16x96xf32> to vector<16x8xf32>
    %32 = vector.extract_strided_slice %8 {offsets = [0, 72], sizes = [16, 8], strides = [1, 1]} : vector<16x96xf32> to vector<16x8xf32>
    %33 = vector.extract_strided_slice %8 {offsets = [0, 80], sizes = [16, 8], strides = [1, 1]} : vector<16x96xf32> to vector<16x8xf32>
    %34 = vector.extract_strided_slice %8 {offsets = [0, 88], sizes = [16, 8], strides = [1, 1]} : vector<16x96xf32> to vector<16x8xf32>
    %35 = vector.shape_cast %31 : vector<16x8xf32> to vector<1x16x8xf32>
    %36 = vector.shape_cast %32 : vector<16x8xf32> to vector<1x16x8xf32>
    %37 = vector.shape_cast %33 : vector<16x8xf32> to vector<1x16x8xf32>
    %38 = vector.shape_cast %34 : vector<16x8xf32> to vector<1x16x8xf32>
    %39 = tpu.concatenate %35, %36, %37, %38 in 0 : vector<1x16x8xf32>, vector<1x16x8xf32>, vector<1x16x8xf32>, vector<1x16x8xf32> -> vector<4x16x8xf32>
    %40 = vector.shape_cast %39 : vector<4x16x8xf32> to vector<8x8x8xf32>
    %41 = arith.truncf %40 : vector<8x8x8xf32> to vector<8x8x8xbf16>
    "tpu.trace_start"() <{level = 10 : i32, message = "bld,bmd->blm"}> : () -> ()
    %cst_6 = arith.constant dense<0.000000e+00> : vector<8x8x8xf32>
    %42 = tpu.matmul %19, %30, %cst_6 {dimension_numbers = #tpu.dot_dimension_numbers<[2], [2], [1], [1], [0, 0, 0, 1, 1, 1], [0], [0]>} : vector<8x8x8xbf16>, vector<8x8x8xbf16>, vector<8x8x8xf32> -> vector<8x8x8xf32>
    "tpu.trace_stop"() : () -> ()
    %cst_7 = arith.constant dense<0xFF800000> : vector<8x8xf32>
    %43 = vector.multi_reduction <maximumf>, %42, %cst_7 [2] : vector<8x8x8xf32> to vector<8x8xf32>
    %44 = vector.shape_cast %43 : vector<8x8xf32> to vector<8x8x1xf32>
    %45 = vector.broadcast %44 : vector<8x8x1xf32> to vector<8x8x8xf32>
    %46 = arith.subf %42, %45 : vector<8x8x8xf32>
    %47 = math.exp %46 : vector<8x8x8xf32>
    %cst_8 = arith.constant dense<0.000000e+00> : vector<8x8xf32>
    %48 = vector.multi_reduction <add>, %47, %cst_8 [2] : vector<8x8x8xf32> to vector<8x8xf32>
    %49 = vector.shape_cast %48 : vector<8x8xf32> to vector<8x8x1xf32>
    %50 = tpu.reciprocal %49 {approx = true} : vector<8x8x1xf32> -> vector<8x8x1xf32>
    %51 = vector.broadcast %50 : vector<8x8x1xf32> to vector<8x8x8xf32>
    %52 = arith.mulf %47, %51 : vector<8x8x8xf32>
    %53 = arith.truncf %52 : vector<8x8x8xf32> to vector<8x8x8xbf16>
    "tpu.trace_start"() <{level = 10 : i32, message = "blm,bmd->bld"}> : () -> ()
    %cst_9 = arith.constant dense<0.000000e+00> : vector<8x8x8xf32>
    %54 = tpu.matmul %53, %41, %cst_9 {dimension_numbers = #tpu.dot_dimension_numbers<[2], [1], [1], [2], [0, 0, 0, 1, 1, 2], [0], [0]>} : vector<8x8x8xbf16>, vector<8x8x8xbf16>, vector<8x8x8xf32> -> vector<8x8x8xf32>
    "tpu.trace_stop"() : () -> ()
    %55 = vector.shape_cast %54 : vector<8x8x8xf32> to vector<4x2x8x8xf32>
    %56 = vector.extract_strided_slice %55 {offsets = [0, 0, 0, 0], sizes = [1, 2, 8, 8], strides = [1, 1, 1, 1]} : vector<4x2x8x8xf32> to vector<1x2x8x8xf32>
    %57 = vector.shape_cast %56 : vector<1x2x8x8xf32> to vector<2x8x8xf32>
    %58 = vector.extract_strided_slice %55 {offsets = [1, 0, 0, 0], sizes = [1, 2, 8, 8], strides = [1, 1, 1, 1]} : vector<4x2x8x8xf32> to vector<1x2x8x8xf32>
    %59 = vector.shape_cast %58 : vector<1x2x8x8xf32> to vector<2x8x8xf32>
    %60 = vector.extract_strided_slice %55 {offsets = [2, 0, 0, 0], sizes = [1, 2, 8, 8], strides = [1, 1, 1, 1]} : vector<4x2x8x8xf32> to vector<1x2x8x8xf32>
    %61 = vector.shape_cast %60 : vector<1x2x8x8xf32> to vector<2x8x8xf32>
    %62 = vector.extract_strided_slice %55 {offsets = [3, 0, 0, 0], sizes = [1, 2, 8, 8], strides = [1, 1, 1, 1]} : vector<4x2x8x8xf32> to vector<1x2x8x8xf32>
    %63 = vector.shape_cast %62 : vector<1x2x8x8xf32> to vector<2x8x8xf32>
    %64 = tpu.concatenate %57, %59, %61, %63 in 2 : vector<2x8x8xf32>, vector<2x8x8xf32>, vector<2x8x8xf32>, vector<2x8x8xf32> -> vector<2x8x32xf32>
    %65 = vector.shape_cast %64 : vector<2x8x32xf32> to vector<16x32xf32>
    %66 = arith.truncf %65 : vector<16x32xf32> to vector<16x32xbf16>
    %c0_10 = arith.constant 0 : index
    %c0_11 = arith.constant 0 : index
    %67 = vector.load %arg3[%c0_10, %c0_11] : memref<32x32xbf16, #tpu.memory_space<vmem>>, vector<32x32xbf16>
    %cst_12 = arith.constant dense<0.000000e+00> : vector<16x32xf32>
    %68 = tpu.matmul %66, %67, %cst_12 {dimension_numbers = #tpu.dot_dimension_numbers<[1], [0], [0], [1], [0, 0, 1, 1], [], []>} : vector<16x32xbf16>, vector<32x32xbf16>, vector<16x32xf32> -> vector<16x32xf32>
    %c0_13 = arith.constant 0 : index
    %c0_14 = arith.constant 0 : index
    %69 = vector.load %arg4[%c0_13, %c0_14] : memref<1x32xf32, #tpu.memory_space<vmem>>, vector<1x32xf32>
    %70 = vector.broadcast %69 : vector<1x32xf32> to vector<16x32xf32>
    %71 = arith.addf %68, %70 : vector<16x32xf32>
    %72 = arith.addf %2, %71 : vector<16x32xf32>
    %73 = vector.shape_cast %72 : vector<16x32xf32> to vector<2x8x32xf32>
    %cst_15 = arith.constant dense<0.000000e+00> : vector<2x32xf32>
    %74 = vector.multi_reduction <add>, %73, %cst_15 [1] : vector<2x8x32xf32> to vector<2x32xf32>
    %75 = vector.shape_cast %74 : vector<2x32xf32> to vector<2x1x32xf32>
    %cst_16 = arith.constant 8.000000e+00 : f32
    %76 = vector.broadcast %cst_16 : f32 to vector<2x1x32xf32>
    %77 = arith.divf %75, %76 : vector<2x1x32xf32>
    %78 = vector.broadcast %77 : vector<2x1x32xf32> to vector<2x8x32xf32>
    %79 = arith.subf %73, %78 : vector<2x8x32xf32>
    %80 = arith.mulf %79, %79 : vector<2x8x32xf32>
    %cst_17 = arith.constant dense<0.000000e+00> : vector<2x32xf32>
    %81 = vector.multi_reduction <add>, %80, %cst_17 [1] : vector<2x8x32xf32> to vector<2x32xf32>
    %82 = vector.shape_cast %81 : vector<2x32xf32> to vector<2x1x32xf32>
    %cst_18 = arith.constant 8.000000e+00 : f32
    %83 = vector.broadcast %cst_18 : f32 to vector<2x1x32xf32>
    %84 = arith.divf %82, %83 : vector<2x1x32xf32>
    %85 = vector.broadcast %77 : vector<2x1x32xf32> to vector<2x8x32xf32>
    %86 = arith.subf %73, %85 : vector<2x8x32xf32>
    %cst_19 = arith.constant 9.99999974E-6 : f32
    %87 = vector.broadcast %cst_19 : f32 to vector<2x1x32xf32>
    %88 = arith.addf %84, %87 : vector<2x1x32xf32>
    %89 = math.rsqrt %88 : vector<2x1x32xf32>
    %90 = vector.broadcast %89 : vector<2x1x32xf32> to vector<2x8x32xf32>
    %91 = arith.mulf %86, %90 : vector<2x8x32xf32>
    %cst_20 = arith.constant 0.000000e+00 : f32
    %92 = vector.broadcast %cst_20 : f32 to vector<2x8x32xf32>
    %93 = arith.maximumf %91, %92 : vector<2x8x32xf32>
    %94 = tpu.transpose %93, [1, 0, 2] : vector<2x8x32xf32> -> vector<8x2x32xf32>
    %c0_21 = arith.constant 0 : index
    %c0_22 = arith.constant 0 : index
    %c0_23 = arith.constant 0 : index
    %95 = vector.load %arg5[%c0_21, %c0_22, %c0_23] : memref<8x2x32xf32, #tpu.memory_space<vmem>>, vector<8x2x32xf32>
    tpu.vector_store %arg5[%c0_21, %c0_22, %c0_23], %94 {strides = array<i32>} : memref<8x2x32xf32, #tpu.memory_space<vmem>>, vector<8x2x32xf32>,
    return
  }
}

</mosaic_0001>

<llo_original>
// kernel: tpu_custom_call.1
$region0: #{tpu_custom_call.1}
  #allocation0 [shape = 'u32[]', space=smem, size = 0x4, offset = 0x4, fixed_abs, tag = 'smem constant byte address 0x4 - core index']
  #allocation1 [shape = 'u32[144,128]{1,0:T(1,128)}', space=vmem, size = 0x12000, scoped, tag = 'internal scratch']
  %s0 = inlined_call_operand.hbm [shape: f32[8,2,32], index: 0, kind: input, shape index: {}]
  %s1 = inlined_call_operand.hbm [shape: bf16[32,96], index: 1, kind: input, shape index: {}]
  %s2 = inlined_call_operand.vmem [shape: f32[1,96], index: 2, kind: input, shape index: {}]
  %s3 = inlined_call_operand.hbm [shape: bf16[32,32], index: 3, kind: input, shape index: {}]
  %s4 = inlined_call_operand.vmem [shape: f32[1,32], index: 4, kind: input, shape index: {}]
  %s5 = inlined_call_operand.hbm [shape: f32[8,2,32], index: 5, kind: output, shape index: {}]
  %s6 = sld [smem:[#allocation0]]
  $region42: #{tpu_custom_call.1} parent=0
    _
  %s8 = ssub.s32 1, %s6
  %s9 = scalar_select 0, %s8, %s6
  $region1: #{tpu_custom_call.1} parent=0
    #allocation2 [shape = 'u8[8192]{0}', space=vmem, size = 0x2000, scoped, tag = 'input window, operand 0, single buffered']
    #allocation3 [shape = 's32[1]{0}', space=sflag, size = 0x4, scoped, tag = 'scoped memory for tpu_custom_call.1']
    #allocation4 [shape = 's32[1]{0}', space=sflag, size = 0x4, scoped, tag = 'scoped memory for tpu_custom_call.1']
    #allocation5 [shape = 'u8[8192]{0}', space=vmem, size = 0x2000, scoped, tag = 'input window, operand 1, single buffered']
    #allocation6 [shape = 's32[1]{0}', space=sflag, size = 0x4, scoped, tag = 'scoped memory for tpu_custom_call.1']
    #allocation7 [shape = 'u8[8192]{0}', space=vmem, size = 0x2000, scoped, tag = 'input window, operand 3, single buffered']
    #allocation8 [shape = 'u8[8192]{0}', space=vmem, size = 0x2000, scoped, tag = 'output window, operand 0, single buffered']
    %10 = vsyncpa [#allocation3], 0
    %11 = vsyncpa [#allocation6], 0
    %12 = vsyncpa [#allocation4], 0
    // Predicated region
    $region2: #{tpu_custom_call.1} parent=1 // pred_check
      _
    $region3: #{tpu_custom_call.1} parent=1 // pred_check_branch
      %14 = sbr.rel (0) target = $region5
    $region4: #{tpu_custom_call.1} parent=1 // pred_region
      %s16 = ssub.s32 256, 256
      %17 = vsyncadd [#allocation3], %s16
      %s18 = sshll.u32 [#allocation2], 4
      %s19 = int_to_ptr.vmem [resolvable:$true] %s18
      %24 = dma.hbm_to_vmem [thread:$0]  %s0, 256, %s19, [#allocation3], 32, 32, 2
    $region5: #{tpu_custom_call.1} parent=1 // pred_fallthru
      _
    // Predicated region
    $region6: #{tpu_custom_call.1} parent=1 // pred_check
      _
    $region7: #{tpu_custom_call.1} parent=1 // pred_check_branch
      %26 = sbr.rel (0) target = $region9
    $region8: #{tpu_custom_call.1} parent=1 // pred_region
      %s28 = ssub.s32 256, 256
      %29 = vsyncadd [#allocation6], %s28
      %s30 = sshll.u32 [#allocation5], 4
      %s31 = int_to_ptr.vmem [resolvable:$true] %s30
      %36 = dma.hbm_to_vmem [thread:$0]  %s1, 256, %s31, [#allocation6], 64, 64, 4
    $region9: #{tpu_custom_call.1} parent=1 // pred_fallthru
      _
    // Predicated region
    $region10: #{tpu_custom_call.1} parent=1 // pred_check
      _
    $region11: #{tpu_custom_call.1} parent=1 // pred_check_branch
      %38 = sbr.rel (0) target = $region13
    $region12: #{tpu_custom_call.1} parent=1 // pred_region
      _
    $region13: #{tpu_custom_call.1} parent=1 // pred_fallthru
      _
    // Predicated region
    $region14: #{tpu_custom_call.1} parent=1 // pred_check
      _
    $region15: #{tpu_custom_call.1} parent=1 // pred_check_branch
      %40 = sbr.rel (0) target = $region17
    $region16: #{tpu_custom_call.1} parent=1 // pred_region
      %s42 = ssub.s32 256, 256
      %43 = vsyncadd [#allocation6], %s42
      %s44 = sshll.u32 [#allocation7], 4
      %s45 = int_to_ptr.vmem [resolvable:$true] %s44
      %50 = dma.hbm_to_vmem [thread:$0]  %s3, 256, %s45, [#allocation6], 64, 64, 4
    $region17: #{tpu_custom_call.1} parent=1 // pred_fallthru
      _
    // Predicated region
    $region18: #{tpu_custom_call.1} parent=1 // pred_check
      _
    $region19: #{tpu_custom_call.1} parent=1 // pred_check_branch
      %52 = sbr.rel (0) target = $region21
    $region20: #{tpu_custom_call.1} parent=1 // pred_region
      _
    $region21: #{tpu_custom_call.1} parent=1 // pred_fallthru
      _
    // Predicated region
    $region22: #{tpu_custom_call.1} parent=1 // pred_check
      _
    $region23: #{tpu_custom_call.1} parent=1 // pred_check_branch
      %54 = sbr.rel (0) target = $region25
    $region24: #{tpu_custom_call.1} parent=1 // pred_region
      %55 = dma.done [#allocation3], 256
    $region25: #{tpu_custom_call.1} parent=1 // pred_fallthru
      _
    // Predicated region
    $region26: #{tpu_custom_call.1} parent=1 // pred_check
      _
    $region27: #{tpu_custom_call.1} parent=1 // pred_check_branch
      %57 = sbr.rel (0) target = $region29
    $region28: #{tpu_custom_call.1} parent=1 // pred_region
      %58 = dma.done [#allocation6], 256
    $region29: #{tpu_custom_call.1} parent=1 // pred_fallthru
      _
    // Predicated region
    $region30: #{tpu_custom_call.1} parent=1 // pred_check
      _
    $region31: #{tpu_custom_call.1} parent=1 // pred_check_branch
      %60 = sbr.rel (0) target = $region33
    $region32: #{tpu_custom_call.1} parent=1 // pred_region
      %61 = dma.done [#allocation6], 256
    $region33: #{tpu_custom_call.1} parent=1 // pred_fallthru
      _
    %v63 = vld [vmem:[#allocation2] sm:$0x3]
    %v64 = vld [vmem:[#allocation2 + $0x2] sm:$0x3]
    %v65 = vld [vmem:[#allocation2 + $0x4] sm:$0x3]
    %v66 = vld [vmem:[#allocation2 + $0x6] sm:$0x3]
    %v67 = vld [vmem:[#allocation2 + $0x8] sm:$0x3]
    %v68 = vld [vmem:[#allocation2 + $0xa] sm:$0x3]
    %v69 = vld [vmem:[#allocation2 + $0xc] sm:$0x3]
    %v70 = vld [vmem:[#allocation2 + $0xe] sm:$0x3]
    %v71 = vcombine.low %v63, %v65
    %v73 = vunpack.c.l.s4 1983009808
    %v74 = vunpack.c.0.s8 %v73
    %v75 = vlaneseq
    %v76 = vshrl.u32 %v75, 7
    %v77 = vsub.s32 %v74, %v76
    %v78 = vrot.slane %v71, %v77
    %v79 = vcombine.low %v64, %v66
    %v81 = vunpack.c.l.s4 1983009808
    %v82 = vunpack.c.0.s8 %v81
    %v83 = vlaneseq
    %v84 = vshrl.u32 %v83, 7
    %v85 = vsub.s32 %v82, %v84
    %v86 = vrot.slane %v79, %v85
    %v87 = vcombine.low %v67, %v69
    %v89 = vunpack.c.l.s4 1983009808
    %v90 = vunpack.c.0.s8 %v89
    %v91 = vlaneseq
    %v92 = vshrl.u32 %v91, 7
    %v93 = vsub.s32 %v90, %v92
    %v94 = vrot.slane %v87, %v93
    %v95 = vcombine.low %v68, %v70
    %v97 = vunpack.c.l.s4 1983009808
    %v98 = vunpack.c.0.s8 %v97
    %v99 = vlaneseq
    %v100 = vshrl.u32 %v99, 7
    %v101 = vsub.s32 %v98, %v100
    %v102 = vrot.slane %v95, %v101
    %v103 = vcombine.low %v78, %v86
    %v105 = vunpack.c.l.s4 1934713408
    %v106 = vunpack.c.0.s8 %v105
    %v107 = vlaneseq
    %v108 = vshrl.u32 %v107, 7
    %v109 = vsub.s32 %v106, %v108
    %v110 = vrot.slane %v103, %v109
    %v111 = vcombine.low %v94, %v102
    %v113 = vunpack.c.l.s4 1934713408
    %v114 = vunpack.c.0.s8 %v113
    %v115 = vlaneseq
    %v116 = vshrl.u32 %v115, 7
    %v117 = vsub.s32 %v114, %v116
    %v118 = vrot.slane %v111, %v117
    %v119 = vcombine.low %v110, %v118
    %v120 = vcombine.high %v110, %v118
    %v121 = vpack.c.bf16 %v120, %v119
    %v122 = vld [vmem:[#allocation5] sm:$0xf]
    %v123 = vld [vmem:[#allocation5 + $0x4] sm:$0xf]
    %v124 = vld [vmem:[#allocation5 + $0x8] sm:$0xf]
    %v125 = vld [vmem:[#allocation5 + $0xc] sm:$0xf]
    %v126 = vld [vmem:[%s2] sm:$0x1]
    %v128 = vlaneseq
    %v129 = vshrl.u32 %v128, 7
    %v130 = vsub.s32 0, %v129
    %v131 = vrot.slane %v126, %v130
    %v137 = vunpack.c.l.b16 %v122
    %v138 = vunpack.c.l.b16 %v123
    %v139 = vunpack.c.l.b16 %v124
    %v140 = vunpack.c.l.b16 %v125
    %v141 = vpack.c.b16 %v138, %v137
    %v142 = vpack.c.b16 %v140, %v139
    %vm145 = vcmask 261120
    %v147 = vsel %vm145, %v121, 0
    %149 = vmatprep.subr.bf16.mxu0 0
    %150 = vmatpush1.bf16.msra.mxu0 0
    %151 = vmatprep.subr.bf16.mxu0 0
    %152 = vmatpush1.bf16.msra.mxu0 0
    %153 = vmatprep.subr.bf16.mxu0 0
    %154 = vmatpush1.bf16.msra.mxu0 0
    %155 = vmatprep.subr.bf16.mxu0 0
    %156 = vmatpush1.bf16.msra.mxu0 0
    %157 = vmatprep.subr.bf16.mxu0 0
    %158 = vmatpush1.bf16.msra.mxu0 0
    %159 = vmatprep.subr.bf16.mxu0 0
    %160 = vmatpush1.bf16.msra.mxu0 0
    %161 = vmatprep.subr.bf16.mxu0 0
    %162 = vmatpush1.bf16.msra.mxu0 %v142
    %163 = vmatprep.subr.bf16.mxu0 0
    %164 = vmatpush1.bf16.msra.mxu0 %v141
    %165 = vmatprep.subr.bf16.mxu0 0
    %166 = vmatpush2.bf16.msra.mxu0 0
    %167 = vmatprep.subr.bf16.mxu0 0
    %168 = vmatpush2.bf16.msra.mxu0 0
    %169 = vmatprep.subr.bf16.mxu0 0
    %170 = vmatpush2.bf16.msra.mxu0 0
    %171 = vmatprep.subr.bf16.mxu0 0
    %172 = vmatpush2.bf16.msra.mxu0 0
    %173 = vmatprep.subr.bf16.mxu0 0
    %174 = vmatpush2.bf16.msra.mxu0 0
    %175 = vmatprep.subr.bf16.mxu0 0
    %176 = vmatpush2.bf16.msra.mxu0 0
    %177 = vmatprep.subr.bf16.mxu0 0
    %178 = vmatpush2.bf16.msra.mxu0 0
    %179 = vmatprep.subr.bf16.mxu0 0
    %180 = vmatpush2.bf16.msra.mxu0 0
    %181 = vmatprep.mubr.bf16.mxu0 0
    %182 = vmatmul.mubr.bf16.gmra.mxu0 %v147
    %v183 = vpop.f32.mrf.mxu0
    %v184 = vadd.f32 %v131, %v183
    %v185 = vpop.f32.mrf.mxu0
    %v186 = vpop.f32.mrf.mxu0
    %v187 = vadd.f32 %v131, %v186
    %v188 = vpop.f32.mrf.mxu0
    %189 = vdwg.mxu0
    %192 = vrot.lane.b32.xlu0 %v184, 120
    %v193 = vpop.permute.xlu0 %192
    %194 = vrot.lane.b32.xlu0 %v187, 120
    %v195 = vpop.permute.xlu0 %194
    %198 = vrot.lane.b32.xlu0 %v184, 112
    %v199 = vpop.permute.xlu0 %198
    %200 = vrot.lane.b32.xlu0 %v187, 112
    %v201 = vpop.permute.xlu0 %200
    %204 = vrot.lane.b32.xlu0 %v184, 104
    %v205 = vpop.permute.xlu0 %204
    %206 = vrot.lane.b32.xlu0 %v187, 104
    %v207 = vpop.permute.xlu0 %206
    %v210 = vpack.c.bf16 %v184, %v184
    %v211 = vpack.c.bf16 %v187, %v187
    %v212 = vpack.c.bf16 %v193, %v193
    %v213 = vpack.c.bf16 %v195, %v195
    %v214 = vpack.c.bf16 %v199, %v199
    %v215 = vpack.c.bf16 %v201, %v201
    %v216 = vpack.c.bf16 %v205, %v205
    %v217 = vpack.c.bf16 %v207, %v207
    %219 = vrot.lane.b32.xlu0 %v210, 96
    %v220 = vpop.permute.xlu0 %219
    %vm221 = vcmask 64512
    %v223 = vsel %vm221, %v210, 0
    %v226 = vsel %vm221, %v220, 0
    %228 = vmatprep.subr.bf16.mxu0 0
    %229 = vmatpush1.bf16.xpose.msra.mxu0 0
    %230 = vmatprep.subr.bf16.mxu0 0
    %231 = vmatpush1.bf16.xpose.msra.mxu0 0
    %232 = vmatprep.subr.bf16.mxu0 0
    %233 = vmatpush1.bf16.xpose.msra.mxu0 0
    %234 = vmatprep.subr.bf16.mxu0 0
    %235 = vmatpush1.bf16.xpose.msra.mxu0 0
    %236 = vmatprep.subr.bf16.mxu0 0
    %237 = vmatpush1.bf16.xpose.msra.mxu0 0
    %238 = vmatprep.subr.bf16.mxu0 0
    %239 = vmatpush1.bf16.xpose.msra.mxu0 0
    %240 = vmatprep.subr.bf16.mxu0 0
    %241 = vmatpush1.bf16.xpose.msra.mxu0 0
    %242 = vmatprep.subr.bf16.mxu0 0
    %243 = vmatpush1.bf16.xpose.msra.mxu0 %v226
    %244 = vmatprep.subr.bf16.mxu0 0
    %245 = vmatpush2.bf16.xpose.msra.mxu0 0
    %246 = vmatprep.subr.bf16.mxu0 0
    %247 = vmatpush2.bf16.xpose.msra.mxu0 0
    %248 = vmatprep.subr.bf16.mxu0 0
    %249 = vmatpush2.bf16.xpose.msra.mxu0 0
    %250 = vmatprep.subr.bf16.mxu0 0
    %251 = vmatpush2.bf16.xpose.msra.mxu0 0
    %252 = vmatprep.subr.bf16.mxu0 0
    %253 = vmatpush2.bf16.xpose.msra.mxu0 0
    %254 = vmatprep.subr.bf16.mxu0 0
    %255 = vmatpush2.bf16.xpose.msra.mxu0 0
    %256 = vmatprep.subr.bf16.mxu0 0
    %257 = vmatpush2.bf16.xpose.msra.mxu0 0
    %258 = vmatprep.subr.bf16.mxu0 0
    %259 = vmatpush2.bf16.xpose.msra.mxu0 0
    %260 = vmatprep.mubr.bf16.mxu0 0
    %261 = vmatmul.mubr.bf16.gmra.mxu0 %v223
    %v262 = vpop.f32.mrf.mxu0
    %v263 = vadd.f32 0.0, %v262
    %v264 = vpop.f32.mrf.mxu0
    %v265 = vpop.f32.mrf.mxu0
    %v266 = vpop.f32.mrf.mxu0
    %267 = vdwg.mxu0
    %269 = vrot.lane.b32.xlu0 %v211, 96
    %v270 = vpop.permute.xlu0 %269
    %v272 = vsel %vm221, %v211, 0
    %v275 = vsel %vm221, %v270, 0
    %277 = vmatprep.subr.bf16.mxu0 0
    %278 = vmatpush1.bf16.xpose.msra.mxu0 0
    %279 = vmatprep.subr.bf16.mxu0 0
    %280 = vmatpush1.bf16.xpose.msra.mxu0 0
    %281 = vmatprep.subr.bf16.mxu0 0
    %282 = vmatpush1.bf16.xpose.msra.mxu0 0
    %283 = vmatprep.subr.bf16.mxu0 0
    %284 = vmatpush1.bf16.xpose.msra.mxu0 0
    %285 = vmatprep.subr.bf16.mxu0 0
    %286 = vmatpush1.bf16.xpose.msra.mxu0 0
    %287 = vmatprep.subr.bf16.mxu0 0
    %288 = vmatpush1.bf16.xpose.msra.mxu0 0
    %289 = vmatprep.subr.bf16.mxu0 0
    %290 = vmatpush1.bf16.xpose.msra.mxu0 0
    %291 = vmatprep.subr.bf16.mxu0 0
    %292 = vmatpush1.bf16.xpose.msra.mxu0 %v275
    %293 = vmatprep.subr.bf16.mxu0 0
    %294 = vmatpush2.bf16.xpose.msra.mxu0 0
    %295 = vmatprep.subr.bf16.mxu0 0
    %296 = vmatpush2.bf16.xpose.msra.mxu0 0
    %297 = vmatprep.subr.bf16.mxu0 0
    %298 = vmatpush2.bf16.xpose.msra.mxu0 0
    %299 = vmatprep.subr.bf16.mxu0 0
    %300 = vmatpush2.bf16.xpose.msra.mxu0 0
    %301 = vmatprep.subr.bf16.mxu0 0
    %302 = vmatpush2.bf16.xpose.msra.mxu0 0
    %303 = vmatprep.subr.bf16.mxu0 0
    %304 = vmatpush2.bf16.xpose.msra.mxu0 0
    %305 = vmatprep.subr.bf16.mxu0 0
    %306 = vmatpush2.bf16.xpose.msra.mxu0 0
    %307 = vmatprep.subr.bf16.mxu0 0
    %308 = vmatpush2.bf16.xpose.msra.mxu0 0
    %309 = vmatprep.mubr.bf16.mxu0 0
    %310 = vmatmul.mubr.bf16.gmra.mxu0 %v272
    %v311 = vpop.f32.mrf.mxu0
    %v312 = vadd.f32 0.0, %v311
    %v313 = vpop.f32.mrf.mxu0
    %v314 = vpop.f32.mrf.mxu0
    %v315 = vpop.f32.mrf.mxu0
    %316 = vdwg.mxu0
    %318 = vrot.lane.b32.xlu0 %v212, 96
    %v319 = vpop.permute.xlu0 %318
    %v321 = vsel %vm221, %v212, 0
    %v324 = vsel %vm221, %v319, 0
    %326 = vmatprep.subr.bf16.mxu0 0
    %327 = vmatpush1.bf16.xpose.msra.mxu0 0
    %328 = vmatprep.subr.bf16.mxu0 0
    %329 = vmatpush1.bf16.xpose.msra.mxu0 0
    %330 = vmatprep.subr.bf16.mxu0 0
    %331 = vmatpush1.bf16.xpose.msra.mxu0 0
    %332 = vmatprep.subr.bf16.mxu0 0
    %333 = vmatpush1.bf16.xpose.msra.mxu0 0
    %334 = vmatprep.subr.bf16.mxu0 0
    %335 = vmatpush1.bf16.xpose.msra.mxu0 0
    %336 = vmatprep.subr.bf16.mxu0 0
    %337 = vmatpush1.bf16.xpose.msra.mxu0 0
    %338 = vmatprep.subr.bf16.mxu0 0
    %339 = vmatpush1.bf16.xpose.msra.mxu0 0
    %340 = vmatprep.subr.bf16.mxu0 0
    %341 = vmatpush1.bf16.xpose.msra.mxu0 %v324
    %342 = vmatprep.subr.bf16.mxu0 0
    %343 = vmatpush2.bf16.xpose.msra.mxu0 0
    %344 = vmatprep.subr.bf16.mxu0 0
    %345 = vmatpush2.bf16.xpose.msra.mxu0 0
    %346 = vmatprep.subr.bf16.mxu0 0
    %347 = vmatpush2.bf16.xpose.msra.mxu0 0
    %348 = vmatprep.subr.bf16.mxu0 0
    %349 = vmatpush2.bf16.xpose.msra.mxu0 0
    %350 = vmatprep.subr.bf16.mxu0 0
    %351 = vmatpush2.bf16.xpose.msra.mxu0 0
    %352 = vmatprep.subr.bf16.mxu0 0
    %353 = vmatpush2.bf16.xpose.msra.mxu0 0
    %354 = vmatprep.subr.bf16.mxu0 0
    %355 = vmatpush2.bf16.xpose.msra.mxu0 0
    %356 = vmatprep.subr.bf16.mxu0 0
    %357 = vmatpush2.bf16.xpose.msra.mxu0 0
    %358 = vmatprep.mubr.bf16.mxu0 0
    %359 = vmatmul.mubr.bf16.gmra.mxu0 %v321
    %v360 = vpop.f32.mrf.mxu0
    %v361 = vadd.f32 0.0, %v360
    %v362 = vpop.f32.mrf.mxu0
    %v363 = vpop.f32.mrf.mxu0
    %v364 = vpop.f32.mrf.mxu0
    %365 = vdwg.mxu0
    %367 = vrot.lane.b32.xlu0 %v213, 96
    %v368 = vpop.permute.xlu0 %367
    %v370 = vsel %vm221, %v213, 0
    %v373 = vsel %vm221, %v368, 0
    %375 = vmatprep.subr.bf16.mxu0 0
    %376 = vmatpush1.bf16.xpose.msra.mxu0 0
    %377 = vmatprep.subr.bf16.mxu0 0
    %378 = vmatpush1.bf16.xpose.msra.mxu0 0
    %379 = vmatprep.subr.bf16.mxu0 0
    %380 = vmatpush1.bf16.xpose.msra.mxu0 0
    %381 = vmatprep.subr.bf16.mxu0 0
    %382 = vmatpush1.bf16.xpose.msra.mxu0 0
    %383 = vmatprep.subr.bf16.mxu0 0
    %384 = vmatpush1.bf16.xpose.msra.mxu0 0
    %385 = vmatprep.subr.bf16.mxu0 0
    %386 = vmatpush1.bf16.xpose.msra.mxu0 0
    %387 = vmatprep.subr.bf16.mxu0 0
    %388 = vmatpush1.bf16.xpose.msra.mxu0 0
    %389 = vmatprep.subr.bf16.mxu0 0
    %390 = vmatpush1.bf16.xpose.msra.mxu0 %v373
    %391 = vmatprep.subr.bf16.mxu0 0
    %392 = vmatpush2.bf16.xpose.msra.mxu0 0
    %393 = vmatprep.subr.bf16.mxu0 0
    %394 = vmatpush2.bf16.xpose.msra.mxu0 0
    %395 = vmatprep.subr.bf16.mxu0 0
    %396 = vmatpush2.bf16.xpose.msra.mxu0 0
    %397 = vmatprep.subr.bf16.mxu0 0
    %398 = vmatpush2.bf16.xpose.msra.mxu0 0
    %399 = vmatprep.subr.bf16.mxu0 0
    %400 = vmatpush2.bf16.xpose.msra.mxu0 0
    %401 = vmatprep.subr.bf16.mxu0 0
    %402 = vmatpush2.bf16.xpose.msra.mxu0 0
    %403 = vmatprep.subr.bf16.mxu0 0
    %404 = vmatpush2.bf16.xpose.msra.mxu0 0
    %405 = vmatprep.subr.bf16.mxu0 0
    %406 = vmatpush2.bf16.xpose.msra.mxu0 0
    %407 = vmatprep.mubr.bf16.mxu0 0
    %408 = vmatmul.mubr.bf16.gmra.mxu0 %v370
    %v409 = vpop.f32.mrf.mxu0
    %v410 = vadd.f32 0.0, %v409
    %v411 = vpop.f32.mrf.mxu0
    %v412 = vpop.f32.mrf.mxu0
    %v413 = vpop.f32.mrf.mxu0
    %414 = vdwg.mxu0
    %416 = vrot.lane.b32.xlu0 %v214, 96
    %v417 = vpop.permute.xlu0 %416
    %v419 = vsel %vm221, %v214, 0
    %v422 = vsel %vm221, %v417, 0
    %424 = vmatprep.subr.bf16.mxu0 0
    %425 = vmatpush1.bf16.xpose.msra.mxu0 0
    %426 = vmatprep.subr.bf16.mxu0 0
    %427 = vmatpush1.bf16.xpose.msra.mxu0 0
    %428 = vmatprep.subr.bf16.mxu0 0
    %429 = vmatpush1.bf16.xpose.msra.mxu0 0
    %430 = vmatprep.subr.bf16.mxu0 0
    %431 = vmatpush1.bf16.xpose.msra.mxu0 0
    %432 = vmatprep.subr.bf16.mxu0 0
    %433 = vmatpush1.bf16.xpose.msra.mxu0 0
    %434 = vmatprep.subr.bf16.mxu0 0
    %435 = vmatpush1.bf16.xpose.msra.mxu0 0
    %436 = vmatprep.subr.bf16.mxu0 0
    %437 = vmatpush1.bf16.xpose.msra.mxu0 0
    %438 = vmatprep.subr.bf16.mxu0 0
    %439 = vmatpush1.bf16.xpose.msra.mxu0 %v422
    %440 = vmatprep.subr.bf16.mxu0 0
    %441 = vmatpush2.bf16.xpose.msra.mxu0 0
    %442 = vmatprep.subr.bf16.mxu0 0
    %443 = vmatpush2.bf16.xpose.msra.mxu0 0
    %444 = vmatprep.subr.bf16.mxu0 0
    %445 = vmatpush2.bf16.xpose.msra.mxu0 0
    %446 = vmatprep.subr.bf16.mxu0 0
    %447 = vmatpush2.bf16.xpose.msra.mxu0 0
    %448 = vmatprep.subr.bf16.mxu0 0
    %449 = vmatpush2.bf16.xpose.msra.mxu0 0
    %450 = vmatprep.subr.bf16.mxu0 0
    %451 = vmatpush2.bf16.xpose.msra.mxu0 0
    %452 = vmatprep.subr.bf16.mxu0 0
    %453 = vmatpush2.bf16.xpose.msra.mxu0 0
    %454 = vmatprep.subr.bf16.mxu0 0
    %455 = vmatpush2.bf16.xpose.msra.mxu0 0
    %456 = vmatprep.mubr.bf16.mxu0 0
    %457 = vmatmul.mubr.bf16.gmra.mxu0 %v419
    %v458 = vpop.f32.mrf.mxu0
    %v459 = vadd.f32 0.0, %v458
    %v460 = vpop.f32.mrf.mxu0
    %v461 = vpop.f32.mrf.mxu0
    %v462 = vpop.f32.mrf.mxu0
    %463 = vdwg.mxu0
    %465 = vrot.lane.b32.xlu0 %v215, 96
    %v466 = vpop.permute.xlu0 %465
    %v468 = vsel %vm221, %v215, 0
    %v471 = vsel %vm221, %v466, 0
    %473 = vmatprep.subr.bf16.mxu0 0
    %474 = vmatpush1.bf16.xpose.msra.mxu0 0
    %475 = vmatprep.subr.bf16.mxu0 0
    %476 = vmatpush1.bf16.xpose.msra.mxu0 0
    %477 = vmatprep.subr.bf16.mxu0 0
    %478 = vmatpush1.bf16.xpose.msra.mxu0 0
    %479 = vmatprep.subr.bf16.mxu0 0
    %480 = vmatpush1.bf16.xpose.msra.mxu0 0
    %481 = vmatprep.subr.bf16.mxu0 0
    %482 = vmatpush1.bf16.xpose.msra.mxu0 0
    %483 = vmatprep.subr.bf16.mxu0 0
    %484 = vmatpush1.bf16.xpose.msra.mxu0 0
    %485 = vmatprep.subr.bf16.mxu0 0
    %486 = vmatpush1.bf16.xpose.msra.mxu0 0
    %487 = vmatprep.subr.bf16.mxu0 0
    %488 = vmatpush1.bf16.xpose.msra.mxu0 %v471
    %489 = vmatprep.subr.bf16.mxu0 0
    %490 = vmatpush2.bf16.xpose.msra.mxu0 0
    %491 = vmatprep.subr.bf16.mxu0 0
    %492 = vmatpush2.bf16.xpose.msra.mxu0 0
    %493 = vmatprep.subr.bf16.mxu0 0
    %494 = vmatpush2.bf16.xpose.msra.mxu0 0
    %495 = vmatprep.subr.bf16.mxu0 0
    %496 = vmatpush2.bf16.xpose.msra.mxu0 0
    %497 = vmatprep.subr.bf16.mxu0 0
    %498 = vmatpush2.bf16.xpose.msra.mxu0 0
    %499 = vmatprep.subr.bf16.mxu0 0
    %500 = vmatpush2.bf16.xpose.msra.mxu0 0
    %501 = vmatprep.subr.bf16.mxu0 0
    %502 = vmatpush2.bf16.xpose.msra.mxu0 0
    %503 = vmatprep.subr.bf16.mxu0 0
    %504 = vmatpush2.bf16.xpose.msra.mxu0 0
    %505 = vmatprep.mubr.bf16.mxu0 0
    %506 = vmatmul.mubr.bf16.gmra.mxu0 %v468
    %v507 = vpop.f32.mrf.mxu0
    %v508 = vadd.f32 0.0, %v507
    %v509 = vpop.f32.mrf.mxu0
    %v510 = vpop.f32.mrf.mxu0
    %v511 = vpop.f32.mrf.mxu0
    %512 = vdwg.mxu0
    %514 = vrot.lane.b32.xlu0 %v216, 96
    %v515 = vpop.permute.xlu0 %514
    %v517 = vsel %vm221, %v216, 0
    %v520 = vsel %vm221, %v515, 0
    %522 = vmatprep.subr.bf16.mxu0 0
    %523 = vmatpush1.bf16.xpose.msra.mxu0 0
    %524 = vmatprep.subr.bf16.mxu0 0
    %525 = vmatpush1.bf16.xpose.msra.mxu0 0
    %526 = vmatprep.subr.bf16.mxu0 0
    %527 = vmatpush1.bf16.xpose.msra.mxu0 0
    %528 = vmatprep.subr.bf16.mxu0 0
    %529 = vmatpush1.bf16.xpose.msra.mxu0 0
    %530 = vmatprep.subr.bf16.mxu0 0
    %531 = vmatpush1.bf16.xpose.msra.mxu0 0
    %532 = vmatprep.subr.bf16.mxu0 0
    %533 = vmatpush1.bf16.xpose.msra.mxu0 0
    %534 = vmatprep.subr.bf16.mxu0 0
    %535 = vmatpush1.bf16.xpose.msra.mxu0 0
    %536 = vmatprep.subr.bf16.mxu0 0
    %537 = vmatpush1.bf16.xpose.msra.mxu0 %v520
    %538 = vmatprep.subr.bf16.mxu0 0
    %539 = vmatpush2.bf16.xpose.msra.mxu0 0
    %540 = vmatprep.subr.bf16.mxu0 0
    %541 = vmatpush2.bf16.xpose.msra.mxu0 0
    %542 = vmatprep.subr.bf16.mxu0 0
    %543 = vmatpush2.bf16.xpose.msra.mxu0 0
    %544 = vmatprep.subr.bf16.mxu0 0
    %545 = vmatpush2.bf16.xpose.msra.mxu0 0
    %546 = vmatprep.subr.bf16.mxu0 0
    %547 = vmatpush2.bf16.xpose.msra.mxu0 0
    %548 = vmatprep.subr.bf16.mxu0 0
    %549 = vmatpush2.bf16.xpose.msra.mxu0 0
    %550 = vmatprep.subr.bf16.mxu0 0
    %551 = vmatpush2.bf16.xpose.msra.mxu0 0
    %552 = vmatprep.subr.bf16.mxu0 0
    %553 = vmatpush2.bf16.xpose.msra.mxu0 0
    %554 = vmatprep.mubr.bf16.mxu0 0
    %555 = vmatmul.mubr.bf16.gmra.mxu0 %v517
    %v556 = vpop.f32.mrf.mxu0
    %v557 = vadd.f32 0.0, %v556
    %v558 = vpop.f32.mrf.mxu0
    %v559 = vpop.f32.mrf.mxu0
    %v560 = vpop.f32.mrf.mxu0
    %561 = vdwg.mxu0
    %563 = vrot.lane.b32.xlu0 %v217, 96
    %v564 = vpop.permute.xlu0 %563
    %v566 = vsel %vm221, %v217, 0
    %v569 = vsel %vm221, %v564, 0
    %571 = vmatprep.subr.bf16.mxu0 0
    %572 = vmatpush1.bf16.xpose.msra.mxu0 0
    %573 = vmatprep.subr.bf16.mxu0 0
    %574 = vmatpush1.bf16.xpose.msra.mxu0 0
    %575 = vmatprep.subr.bf16.mxu0 0
    %576 = vmatpush1.bf16.xpose.msra.mxu0 0
    %577 = vmatprep.subr.bf16.mxu0 0
    %578 = vmatpush1.bf16.xpose.msra.mxu0 0
    %579 = vmatprep.subr.bf16.mxu0 0
    %580 = vmatpush1.bf16.xpose.msra.mxu0 0
    %581 = vmatprep.subr.bf16.mxu0 0
    %582 = vmatpush1.bf16.xpose.msra.mxu0 0
    %583 = vmatprep.subr.bf16.mxu0 0
    %584 = vmatpush1.bf16.xpose.msra.mxu0 0
    %585 = vmatprep.subr.bf16.mxu0 0
    %586 = vmatpush1.bf16.xpose.msra.mxu0 %v569
    %587 = vmatprep.subr.bf16.mxu0 0
    %588 = vmatpush2.bf16.xpose.msra.mxu0 0
    %589 = vmatprep.subr.bf16.mxu0 0
    %590 = vmatpush2.bf16.xpose.msra.mxu0 0
    %591 = vmatprep.subr.bf16.mxu0 0
    %592 = vmatpush2.bf16.xpose.msra.mxu0 0
    %593 = vmatprep.subr.bf16.mxu0 0
    %594 = vmatpush2.bf16.xpose.msra.mxu0 0
    %595 = vmatprep.subr.bf16.mxu0 0
    %596 = vmatpush2.bf16.xpose.msra.mxu0 0
    %597 = vmatprep.subr.bf16.mxu0 0
    %598 = vmatpush2.bf16.xpose.msra.mxu0 0
    %599 = vmatprep.subr.bf16.mxu0 0
    %600 = vmatpush2.bf16.xpose.msra.mxu0 0
    %601 = vmatprep.subr.bf16.mxu0 0
    %602 = vmatpush2.bf16.xpose.msra.mxu0 0
    %603 = vmatprep.mubr.bf16.mxu0 0
    %604 = vmatmul.mubr.bf16.gmra.mxu0 %v566
    %v605 = vpop.f32.mrf.mxu0
    %v606 = vadd.f32 0.0, %v605
    %v607 = vpop.f32.mrf.mxu0
    %v608 = vpop.f32.mrf.mxu0
    %v609 = vpop.f32.mrf.mxu0
    %610 = vdwg.mxu0
    %v611 = vsel %vm221, %v263, -inf
    %612 = vmax.xlane.f32.xlu0 %v611
    %v613 = vpop.xlane.xlu0 %612
    %v614 = vsel %vm221, %v312, -inf
    %615 = vmax.xlane.f32.xlu0 %v614
    %v616 = vpop.xlane.xlu0 %615
    %v617 = vsel %vm221, %v361, -inf
    %618 = vmax.xlane.f32.xlu0 %v617
    %v619 = vpop.xlane.xlu0 %618
    %v620 = vsel %vm221, %v410, -inf
    %621 = vmax.xlane.f32.xlu0 %v620
    %v622 = vpop.xlane.xlu0 %621
    %v623 = vsel %vm221, %v459, -inf
    %624 = vmax.xlane.f32.xlu0 %v623
    %v625 = vpop.xlane.xlu0 %624
    %v626 = vsel %vm221, %v508, -inf
    %627 = vmax.xlane.f32.xlu0 %v626
    %v628 = vpop.xlane.xlu0 %627
    %v629 = vsel %vm221, %v557, -inf
    %630 = vmax.xlane.f32.xlu0 %v629
    %v631 = vpop.xlane.xlu0 %630
    %v632 = vsel %vm221, %v606, -inf
    %633 = vmax.xlane.f32.xlu0 %v632
    %v634 = vpop.xlane.xlu0 %633
    %v635 = vsub.f32 %v263, %v613
    %v636 = vsub.f32 %v312, %v616
    %v637 = vsub.f32 %v361, %v619
    %v638 = vsub.f32 %v410, %v622
    %v639 = vsub.f32 %v459, %v625
    %v640 = vsub.f32 %v508, %v628
    %v641 = vsub.f32 %v557, %v631
    %v642 = vsub.f32 %v606, %v634
    %v643 = vmul.f32 %v635, 1.442695
    %v644 = vpow.pop %v643
    %v645 = vmul.f32 %v636, 1.442695
    %v646 = vpow.pop %v645
    %v647 = vmul.f32 %v637, 1.442695
    %v648 = vpow.pop %v647
    %v649 = vmul.f32 %v638, 1.442695
    %v650 = vpow.pop %v649
    %v651 = vmul.f32 %v639, 1.442695
    %v652 = vpow.pop %v651
    %v653 = vmul.f32 %v640, 1.442695
    %v654 = vpow.pop %v653
    %v655 = vmul.f32 %v641, 1.442695
    %v656 = vpow.pop %v655
    %v657 = vmul.f32 %v642, 1.442695
    %v658 = vpow.pop %v657
    %v659 = vsel %vm221, %v644, 0.0
    %660 = vadd.xlane.f32.xlu0 %v659
    %v661 = vpop.xlane.xlu0 %660
    %v662 = vsel %vm221, %v646, 0.0
    %663 = vadd.xlane.f32.xlu0 %v662
    %v664 = vpop.xlane.xlu0 %663
    %v665 = vsel %vm221, %v648, 0.0
    %666 = vadd.xlane.f32.xlu0 %v665
    %v667 = vpop.xlane.xlu0 %666
    %v668 = vsel %vm221, %v650, 0.0
    %669 = vadd.xlane.f32.xlu0 %v668
    %v670 = vpop.xlane.xlu0 %669
    %v671 = vsel %vm221, %v652, 0.0
    %672 = vadd.xlane.f32.xlu0 %v671
    %v673 = vpop.xlane.xlu0 %672
    %v674 = vsel %vm221, %v654, 0.0
    %675 = vadd.xlane.f32.xlu0 %v674
    %v676 = vpop.xlane.xlu0 %675
    %v677 = vsel %vm221, %v656, 0.0
    %678 = vadd.xlane.f32.xlu0 %v677
    %v679 = vpop.xlane.xlu0 %678
    %v680 = vsel %vm221, %v658, 0.0
    %681 = vadd.xlane.f32.xlu0 %v680
    %v682 = vpop.xlane.xlu0 %681
    %v683 = vrcp.pop %v661
    %v684 = vrcp.pop %v664
    %v685 = vrcp.pop %v667
    %v686 = vrcp.pop %v670
    %v687 = vrcp.pop %v673
    %v688 = vrcp.pop %v676
    %v689 = vrcp.pop %v679
    %v690 = vrcp.pop %v682
    %v691 = vmul.f32 %v644, %v683
    %v692 = vmul.f32 %v646, %v684
    %v693 = vmul.f32 %v648, %v685
    %v694 = vmul.f32 %v650, %v686
    %v695 = vmul.f32 %v652, %v687
    %v696 = vmul.f32 %v654, %v688
    %v697 = vmul.f32 %v656, %v689
    %v698 = vmul.f32 %v658, %v690
    %v699 = vpack.c.bf16 %v691, %v691
    %v700 = vpack.c.bf16 %v692, %v692
    %v701 = vpack.c.bf16 %v693, %v693
    %v702 = vpack.c.bf16 %v694, %v694
    %v703 = vpack.c.bf16 %v695, %v695
    %v704 = vpack.c.bf16 %v696, %v696
    %v705 = vpack.c.bf16 %v697, %v697
    %v706 = vpack.c.bf16 %v698, %v698
    %707 = vrot.lane.b32.xlu0 %v210, 64
    %v708 = vpop.permute.xlu0 %707
    %v710 = vsel %vm221, %v699, 0
    %vm712 = vcmask 1043456
    %v714 = vsel %vm712, %v708, 0
    %716 = vmatprep.subr.bf16.mxu0 0
    %717 = vmatpush1.bf16.msra.mxu0 0
    %718 = vmatprep.subr.bf16.mxu0 0
    %719 = vmatpush1.bf16.msra.mxu0 0
    %720 = vmatprep.subr.bf16.mxu0 0
    %721 = vmatpush1.bf16.msra.mxu0 0
    %722 = vmatprep.subr.bf16.mxu0 0
    %723 = vmatpush1.bf16.msra.mxu0 0
    %724 = vmatprep.subr.bf16.mxu0 0
    %725 = vmatpush1.bf16.msra.mxu0 0
    %726 = vmatprep.subr.bf16.mxu0 0
    %727 = vmatpush1.bf16.msra.mxu0 0
    %728 = vmatprep.subr.bf16.mxu0 0
    %729 = vmatpush1.bf16.msra.mxu0 0
    %730 = vmatprep.subr.bf16.mxu0 0
    %731 = vmatpush1.bf16.msra.mxu0 %v714
    %732 = vmatprep.subr.bf16.mxu0 0
    %733 = vmatpush2.bf16.msra.mxu0 0
    %734 = vmatprep.subr.bf16.mxu0 0
    %735 = vmatpush2.bf16.msra.mxu0 0
    %736 = vmatprep.subr.bf16.mxu0 0
    %737 = vmatpush2.bf16.msra.mxu0 0
    %738 = vmatprep.subr.bf16.mxu0 0
    %739 = vmatpush2.bf16.msra.mxu0 0
    %740 = vmatprep.subr.bf16.mxu0 0
    %741 = vmatpush2.bf16.msra.mxu0 0
    %742 = vmatprep.subr.bf16.mxu0 0
    %743 = vmatpush2.bf16.msra.mxu0 0
    %744 = vmatprep.subr.bf16.mxu0 0
    %745 = vmatpush2.bf16.msra.mxu0 0
    %746 = vmatprep.subr.bf16.mxu0 0
    %747 = vmatpush2.bf16.msra.mxu0 0
    %748 = vmatprep.mubr.bf16.mxu0 0
    %749 = vmatmul.mubr.bf16.gmra.mxu0 %v710
    %v750 = vpop.f32.mrf.mxu0
    %v751 = vadd.f32 0.0, %v750
    %v752 = vpop.f32.mrf.mxu0
    %v753 = vpop.f32.mrf.mxu0
    %v754 = vpop.f32.mrf.mxu0
    %755 = vdwg.mxu0
    %756 = vrot.lane.b32.xlu0 %v211, 64
    %v757 = vpop.permute.xlu0 %756
    %v759 = vsel %vm221, %v700, 0
    %v762 = vsel %vm712, %v757, 0
    %764 = vmatprep.subr.bf16.mxu0 0
    %765 = vmatpush1.bf16.msra.mxu0 0
    %766 = vmatprep.subr.bf16.mxu0 0
    %767 = vmatpush1.bf16.msra.mxu0 0
    %768 = vmatprep.subr.bf16.mxu0 0
    %769 = vmatpush1.bf16.msra.mxu0 0
    %770 = vmatprep.subr.bf16.mxu0 0
    %771 = vmatpush1.bf16.msra.mxu0 0
    %772 = vmatprep.subr.bf16.mxu0 0
    %773 = vmatpush1.bf16.msra.mxu0 0
    %774 = vmatprep.subr.bf16.mxu0 0
    %775 = vmatpush1.bf16.msra.mxu0 0
    %776 = vmatprep.subr.bf16.mxu0 0
    %777 = vmatpush1.bf16.msra.mxu0 0
    %778 = vmatprep.subr.bf16.mxu0 0
    %779 = vmatpush1.bf16.msra.mxu0 %v762
    %780 = vmatprep.subr.bf16.mxu0 0
    %781 = vmatpush2.bf16.msra.mxu0 0
    %782 = vmatprep.subr.bf16.mxu0 0
    %783 = vmatpush2.bf16.msra.mxu0 0
    %784 = vmatprep.subr.bf16.mxu0 0
    %785 = vmatpush2.bf16.msra.mxu0 0
    %786 = vmatprep.subr.bf16.mxu0 0
    %787 = vmatpush2.bf16.msra.mxu0 0
    %788 = vmatprep.subr.bf16.mxu0 0
    %789 = vmatpush2.bf16.msra.mxu0 0
    %790 = vmatprep.subr.bf16.mxu0 0
    %791 = vmatpush2.bf16.msra.mxu0 0
    %792 = vmatprep.subr.bf16.mxu0 0
    %793 = vmatpush2.bf16.msra.mxu0 0
    %794 = vmatprep.subr.bf16.mxu0 0
    %795 = vmatpush2.bf16.msra.mxu0 0
    %796 = vmatprep.mubr.bf16.mxu0 0
    %797 = vmatmul.mubr.bf16.gmra.mxu0 %v759
    %v798 = vpop.f32.mrf.mxu0
    %v799 = vadd.f32 0.0, %v798
    %v800 = vpop.f32.mrf.mxu0
    %v801 = vpop.f32.mrf.mxu0
    %v802 = vpop.f32.mrf.mxu0
    %803 = vdwg.mxu0
    %804 = vrot.lane.b32.xlu0 %v212, 64
    %v805 = vpop.permute.xlu0 %804
    %v807 = vsel %vm221, %v701, 0
    %v810 = vsel %vm712, %v805, 0
    %812 = vmatprep.subr.bf16.mxu0 0
    %813 = vmatpush1.bf16.msra.mxu0 0
    %814 = vmatprep.subr.bf16.mxu0 0
    %815 = vmatpush1.bf16.msra.mxu0 0
    %816 = vmatprep.subr.bf16.mxu0 0
    %817 = vmatpush1.bf16.msra.mxu0 0
    %818 = vmatprep.subr.bf16.mxu0 0
    %819 = vmatpush1.bf16.msra.mxu0 0
    %820 = vmatprep.subr.bf16.mxu0 0
    %821 = vmatpush1.bf16.msra.mxu0 0
    %822 = vmatprep.subr.bf16.mxu0 0
    %823 = vmatpush1.bf16.msra.mxu0 0
    %824 = vmatprep.subr.bf16.mxu0 0
    %825 = vmatpush1.bf16.msra.mxu0 0
    %826 = vmatprep.subr.bf16.mxu0 0
    %827 = vmatpush1.bf16.msra.mxu0 %v810
    %828 = vmatprep.subr.bf16.mxu0 0
    %829 = vmatpush2.bf16.msra.mxu0 0
    %830 = vmatprep.subr.bf16.mxu0 0
    %831 = vmatpush2.bf16.msra.mxu0 0
    %832 = vmatprep.subr.bf16.mxu0 0
    %833 = vmatpush2.bf16.msra.mxu0 0
    %834 = vmatprep.subr.bf16.mxu0 0
    %835 = vmatpush2.bf16.msra.mxu0 0
    %836 = vmatprep.subr.bf16.mxu0 0
    %837 = vmatpush2.bf16.msra.mxu0 0
    %838 = vmatprep.subr.bf16.mxu0 0
    %839 = vmatpush2.bf16.msra.mxu0 0
    %840 = vmatprep.subr.bf16.mxu0 0
    %841 = vmatpush2.bf16.msra.mxu0 0
    %842 = vmatprep.subr.bf16.mxu0 0
    %843 = vmatpush2.bf16.msra.mxu0 0
    %844 = vmatprep.mubr.bf16.mxu0 0
    %845 = vmatmul.mubr.bf16.gmra.mxu0 %v807
    %v846 = vpop.f32.mrf.mxu0
    %v847 = vadd.f32 0.0, %v846
    %v848 = vpop.f32.mrf.mxu0
    %v849 = vpop.f32.mrf.mxu0
    %v850 = vpop.f32.mrf.mxu0
    %851 = vdwg.mxu0
    %852 = vrot.lane.b32.xlu0 %v213, 64
    %v853 = vpop.permute.xlu0 %852
    %v855 = vsel %vm221, %v702, 0
    %v858 = vsel %vm712, %v853, 0
    %860 = vmatprep.subr.bf16.mxu0 0
    %861 = vmatpush1.bf16.msra.mxu0 0
    %862 = vmatprep.subr.bf16.mxu0 0
    %863 = vmatpush1.bf16.msra.mxu0 0
    %864 = vmatprep.subr.bf16.mxu0 0
    %865 = vmatpush1.bf16.msra.mxu0 0
    %866 = vmatprep.subr.bf16.mxu0 0
    %867 = vmatpush1.bf16.msra.mxu0 0
    %868 = vmatprep.subr.bf16.mxu0 0
    %869 = vmatpush1.bf16.msra.mxu0 0
    %870 = vmatprep.subr.bf16.mxu0 0
    %871 = vmatpush1.bf16.msra.mxu0 0
    %872 = vmatprep.subr.bf16.mxu0 0
    %873 = vmatpush1.bf16.msra.mxu0 0
    %874 = vmatprep.subr.bf16.mxu0 0
    %875 = vmatpush1.bf16.msra.mxu0 %v858
    %876 = vmatprep.subr.bf16.mxu0 0
    %877 = vmatpush2.bf16.msra.mxu0 0
    %878 = vmatprep.subr.bf16.mxu0 0
    %879 = vmatpush2.bf16.msra.mxu0 0
    %880 = vmatprep.subr.bf16.mxu0 0
    %881 = vmatpush2.bf16.msra.mxu0 0
    %882 = vmatprep.subr.bf16.mxu0 0
    %883 = vmatpush2.bf16.msra.mxu0 0
    %884 = vmatprep.subr.bf16.mxu0 0
    %885 = vmatpush2.bf16.msra.mxu0 0
    %886 = vmatprep.subr.bf16.mxu0 0
    %887 = vmatpush2.bf16.msra.mxu0 0
    %888 = vmatprep.subr.bf16.mxu0 0
    %889 = vmatpush2.bf16.msra.mxu0 0
    %890 = vmatprep.subr.bf16.mxu0 0
    %891 = vmatpush2.bf16.msra.mxu0 0
    %892 = vmatprep.mubr.bf16.mxu0 0
    %893 = vmatmul.mubr.bf16.gmra.mxu0 %v855
    %v894 = vpop.f32.mrf.mxu0
    %v895 = vadd.f32 0.0, %v894
    %v896 = vpop.f32.mrf.mxu0
    %v897 = vpop.f32.mrf.mxu0
    %v898 = vpop.f32.mrf.mxu0
    %899 = vdwg.mxu0
    %900 = vrot.lane.b32.xlu0 %v214, 64
    %v901 = vpop.permute.xlu0 %900
    %v903 = vsel %vm221, %v703, 0
    %v906 = vsel %vm712, %v901, 0
    %908 = vmatprep.subr.bf16.mxu0 0
    %909 = vmatpush1.bf16.msra.mxu0 0
    %910 = vmatprep.subr.bf16.mxu0 0
    %911 = vmatpush1.bf16.msra.mxu0 0
    %912 = vmatprep.subr.bf16.mxu0 0
    %913 = vmatpush1.bf16.msra.mxu0 0
    %914 = vmatprep.subr.bf16.mxu0 0
    %915 = vmatpush1.bf16.msra.mxu0 0
    %916 = vmatprep.subr.bf16.mxu0 0
    %917 = vmatpush1.bf16.msra.mxu0 0
    %918 = vmatprep.subr.bf16.mxu0 0
    %919 = vmatpush1.bf16.msra.mxu0 0
    %920 = vmatprep.subr.bf16.mxu0 0
    %921 = vmatpush1.bf16.msra.mxu0 0
    %922 = vmatprep.subr.bf16.mxu0 0
    %923 = vmatpush1.bf16.msra.mxu0 %v906
    %924 = vmatprep.subr.bf16.mxu0 0
    %925 = vmatpush2.bf16.msra.mxu0 0
    %926 = vmatprep.subr.bf16.mxu0 0
    %927 = vmatpush2.bf16.msra.mxu0 0
    %928 = vmatprep.subr.bf16.mxu0 0
    %929 = vmatpush2.bf16.msra.mxu0 0
    %930 = vmatprep.subr.bf16.mxu0 0
    %931 = vmatpush2.bf16.msra.mxu0 0
    %932 = vmatprep.subr.bf16.mxu0 0
    %933 = vmatpush2.bf16.msra.mxu0 0
    %934 = vmatprep.subr.bf16.mxu0 0
    %935 = vmatpush2.bf16.msra.mxu0 0
    %936 = vmatprep.subr.bf16.mxu0 0
    %937 = vmatpush2.bf16.msra.mxu0 0
    %938 = vmatprep.subr.bf16.mxu0 0
    %939 = vmatpush2.bf16.msra.mxu0 0
    %940 = vmatprep.mubr.bf16.mxu0 0
    %941 = vmatmul.mubr.bf16.gmra.mxu0 %v903
    %v942 = vpop.f32.mrf.mxu0
    %v943 = vadd.f32 0.0, %v942
    %v944 = vpop.f32.mrf.mxu0
    %v945 = vpop.f32.mrf.mxu0
    %v946 = vpop.f32.mrf.mxu0
    %947 = vdwg.mxu0
    %948 = vrot.lane.b32.xlu0 %v215, 64
    %v949 = vpop.permute.xlu0 %948
    %v951 = vsel %vm221, %v704, 0
    %v954 = vsel %vm712, %v949, 0
    %956 = vmatprep.subr.bf16.mxu0 0
    %957 = vmatpush1.bf16.msra.mxu0 0
    %958 = vmatprep.subr.bf16.mxu0 0
    %959 = vmatpush1.bf16.msra.mxu0 0
    %960 = vmatprep.subr.bf16.mxu0 0
    %961 = vmatpush1.bf16.msra.mxu0 0
    %962 = vmatprep.subr.bf16.mxu0 0
    %963 = vmatpush1.bf16.msra.mxu0 0
    %964 = vmatprep.subr.bf16.mxu0 0
    %965 = vmatpush1.bf16.msra.mxu0 0
    %966 = vmatprep.subr.bf16.mxu0 0
    %967 = vmatpush1.bf16.msra.mxu0 0
    %968 = vmatprep.subr.bf16.mxu0 0
    %969 = vmatpush1.bf16.msra.mxu0 0
    %970 = vmatprep.subr.bf16.mxu0 0
    %971 = vmatpush1.bf16.msra.mxu0 %v954
    %972 = vmatprep.subr.bf16.mxu0 0
    %973 = vmatpush2.bf16.msra.mxu0 0
    %974 = vmatprep.subr.bf16.mxu0 0
    %975 = vmatpush2.bf16.msra.mxu0 0
    %976 = vmatprep.subr.bf16.mxu0 0
    %977 = vmatpush2.bf16.msra.mxu0 0
    %978 = vmatprep.subr.bf16.mxu0 0
    %979 = vmatpush2.bf16.msra.mxu0 0
    %980 = vmatprep.subr.bf16.mxu0 0
    %981 = vmatpush2.bf16.msra.mxu0 0
    %982 = vmatprep.subr.bf16.mxu0 0
    %983 = vmatpush2.bf16.msra.mxu0 0
    %984 = vmatprep.subr.bf16.mxu0 0
    %985 = vmatpush2.bf16.msra.mxu0 0
    %986 = vmatprep.subr.bf16.mxu0 0
    %987 = vmatpush2.bf16.msra.mxu0 0
    %988 = vmatprep.mubr.bf16.mxu0 0
    %989 = vmatmul.mubr.bf16.gmra.mxu0 %v951
    %v990 = vpop.f32.mrf.mxu0
    %v991 = vadd.f32 0.0, %v990
    %v992 = vpop.f32.mrf.mxu0
    %v993 = vpop.f32.mrf.mxu0
    %v994 = vpop.f32.mrf.mxu0
    %995 = vdwg.mxu0
    %996 = vrot.lane.b32.xlu0 %v216, 64
    %v997 = vpop.permute.xlu0 %996
    %v999 = vsel %vm221, %v705, 0
    %v1002 = vsel %vm712, %v997, 0
    %1004 = vmatprep.subr.bf16.mxu0 0
    %1005 = vmatpush1.bf16.msra.mxu0 0
    %1006 = vmatprep.subr.bf16.mxu0 0
    %1007 = vmatpush1.bf16.msra.mxu0 0
    %1008 = vmatprep.subr.bf16.mxu0 0
    %1009 = vmatpush1.bf16.msra.mxu0 0
    %1010 = vmatprep.subr.bf16.mxu0 0
    %1011 = vmatpush1.bf16.msra.mxu0 0
    %1012 = vmatprep.subr.bf16.mxu0 0
    %1013 = vmatpush1.bf16.msra.mxu0 0
    %1014 = vmatprep.subr.bf16.mxu0 0
    %1015 = vmatpush1.bf16.msra.mxu0 0
    %1016 = vmatprep.subr.bf16.mxu0 0
    %1017 = vmatpush1.bf16.msra.mxu0 0
    %1018 = vmatprep.subr.bf16.mxu0 0
    %1019 = vmatpush1.bf16.msra.mxu0 %v1002
    %1020 = vmatprep.subr.bf16.mxu0 0
    %1021 = vmatpush2.bf16.msra.mxu0 0
    %1022 = vmatprep.subr.bf16.mxu0 0
    %1023 = vmatpush2.bf16.msra.mxu0 0
    %1024 = vmatprep.subr.bf16.mxu0 0
    %1025 = vmatpush2.bf16.msra.mxu0 0
    %1026 = vmatprep.subr.bf16.mxu0 0
    %1027 = vmatpush2.bf16.msra.mxu0 0
    %1028 = vmatprep.subr.bf16.mxu0 0
    %1029 = vmatpush2.bf16.msra.mxu0 0
    %1030 = vmatprep.subr.bf16.mxu0 0
    %1031 = vmatpush2.bf16.msra.mxu0 0
    %1032 = vmatprep.subr.bf16.mxu0 0
    %1033 = vmatpush2.bf16.msra.mxu0 0
    %1034 = vmatprep.subr.bf16.mxu0 0
    %1035 = vmatpush2.bf16.msra.mxu0 0
    %1036 = vmatprep.mubr.bf16.mxu0 0
    %1037 = vmatmul.mubr.bf16.gmra.mxu0 %v999
    %v1038 = vpop.f32.mrf.mxu0
    %v1039 = vadd.f32 0.0, %v1038
    %v1040 = vpop.f32.mrf.mxu0
    %v1041 = vpop.f32.mrf.mxu0
    %v1042 = vpop.f32.mrf.mxu0
    %1043 = vdwg.mxu0
    %1044 = vrot.lane.b32.xlu0 %v217, 64
    %v1045 = vpop.permute.xlu0 %1044
    %v1047 = vsel %vm221, %v706, 0
    %v1050 = vsel %vm712, %v1045, 0
    %1052 = vmatprep.subr.bf16.mxu0 0
    %1053 = vmatpush1.bf16.msra.mxu0 0
    %1054 = vmatprep.subr.bf16.mxu0 0
    %1055 = vmatpush1.bf16.msra.mxu0 0
    %1056 = vmatprep.subr.bf16.mxu0 0
    %1057 = vmatpush1.bf16.msra.mxu0 0
    %1058 = vmatprep.subr.bf16.mxu0 0
    %1059 = vmatpush1.bf16.msra.mxu0 0
    %1060 = vmatprep.subr.bf16.mxu0 0
    %1061 = vmatpush1.bf16.msra.mxu0 0
    %1062 = vmatprep.subr.bf16.mxu0 0
    %1063 = vmatpush1.bf16.msra.mxu0 0
    %1064 = vmatprep.subr.bf16.mxu0 0
    %1065 = vmatpush1.bf16.msra.mxu0 0
    %1066 = vmatprep.subr.bf16.mxu0 0
    %1067 = vmatpush1.bf16.msra.mxu0 %v1050
    %1068 = vmatprep.subr.bf16.mxu0 0
    %1069 = vmatpush2.bf16.msra.mxu0 0
    %1070 = vmatprep.subr.bf16.mxu0 0
    %1071 = vmatpush2.bf16.msra.mxu0 0
    %1072 = vmatprep.subr.bf16.mxu0 0
    %1073 = vmatpush2.bf16.msra.mxu0 0
    %1074 = vmatprep.subr.bf16.mxu0 0
    %1075 = vmatpush2.bf16.msra.mxu0 0
    %1076 = vmatprep.subr.bf16.mxu0 0
    %1077 = vmatpush2.bf16.msra.mxu0 0
    %1078 = vmatprep.subr.bf16.mxu0 0
    %1079 = vmatpush2.bf16.msra.mxu0 0
    %1080 = vmatprep.subr.bf16.mxu0 0
    %1081 = vmatpush2.bf16.msra.mxu0 0
    %1082 = vmatprep.subr.bf16.mxu0 0
    %1083 = vmatpush2.bf16.msra.mxu0 0
    %1084 = vmatprep.mubr.bf16.mxu0 0
    %1085 = vmatmul.mubr.bf16.gmra.mxu0 %v1047
    %v1086 = vpop.f32.mrf.mxu0
    %v1087 = vadd.f32 0.0, %v1086
    %v1088 = vpop.f32.mrf.mxu0
    %v1089 = vpop.f32.mrf.mxu0
    %v1090 = vpop.f32.mrf.mxu0
    %1091 = vdwg.mxu0
    %1094 = vrot.lane.b32.xlu0 %v847, 8
    %v1095 = vpop.permute.xlu0 %1094
    %1096 = vrot.lane.b32.xlu0 %v895, 8
    %v1097 = vpop.permute.xlu0 %1096
    %1102 = vrot.lane.b32.xlu0 %v943, 16
    %v1103 = vpop.permute.xlu0 %1102
    %1104 = vrot.lane.b32.xlu0 %v991, 16
    %v1105 = vpop.permute.xlu0 %1104
    %1110 = vrot.lane.b32.xlu0 %v1039, 24
    %v1111 = vpop.permute.xlu0 %1110
    %1112 = vrot.lane.b32.xlu0 %v1087, 24
    %v1113 = vpop.permute.xlu0 %1112
    %v1116 = vsel %vm221, %v751, %v1095
    %v1117 = vsel %vm221, %v799, %v1097
    %vm1118 = vcmask 130048
    %v1119 = vsel %vm1118, %v1116, %v1103
    %v1120 = vsel %vm1118, %v1117, %v1105
    %vm1121 = vcmask 195584
    %v1122 = vsel %vm1121, %v1119, %v1111
    %v1123 = vsel %vm1121, %v1120, %v1113
    %v1124 = vpack.c.bf16 %v1123, %v1122
    %v1125 = vld [vmem:[#allocation7] sm:$0xf]
    %v1126 = vld [vmem:[#allocation7 + $0x4] sm:$0xf]
    %v1127 = vld [vmem:[#allocation7 + $0x8] sm:$0xf]
    %v1128 = vld [vmem:[#allocation7 + $0xc] sm:$0xf]
    %v1129 = vld [vmem:[%s4] sm:$0x1]
    %v1131 = vlaneseq
    %v1132 = vshrl.u32 %v1131, 7
    %v1133 = vsub.s32 0, %v1132
    %v1134 = vrot.slane %v1129, %v1133
    %v1140 = vunpack.c.l.b16 %v1125
    %v1141 = vunpack.c.l.b16 %v1126
    %v1142 = vunpack.c.l.b16 %v1127
    %v1143 = vunpack.c.l.b16 %v1128
    %v1144 = vpack.c.b16 %v1141, %v1140
    %v1145 = vpack.c.b16 %v1143, %v1142
    %v1149 = vsel %vm145, %v1124, 0
    %1151 = vmatprep.subr.bf16.mxu0 0
    %1152 = vmatpush1.bf16.msra.mxu0 0
    %1153 = vmatprep.subr.bf16.mxu0 0
    %1154 = vmatpush1.bf16.msra.mxu0 0
    %1155 = vmatprep.subr.bf16.mxu0 0
    %1156 = vmatpush1.bf16.msra.mxu0 0
    %1157 = vmatprep.subr.bf16.mxu0 0
    %1158 = vmatpush1.bf16.msra.mxu0 0
    %1159 = vmatprep.subr.bf16.mxu0 0
    %1160 = vmatpush1.bf16.msra.mxu0 0
    %1161 = vmatprep.subr.bf16.mxu0 0
    %1162 = vmatpush1.bf16.msra.mxu0 0
    %1163 = vmatprep.subr.bf16.mxu0 0
    %1164 = vmatpush1.bf16.msra.mxu0 %v1145
    %1165 = vmatprep.subr.bf16.mxu0 0
    %1166 = vmatpush1.bf16.msra.mxu0 %v1144
    %1167 = vmatprep.subr.bf16.mxu0 0
    %1168 = vmatpush2.bf16.msra.mxu0 0
    %1169 = vmatprep.subr.bf16.mxu0 0
    %1170 = vmatpush2.bf16.msra.mxu0 0
    %1171 = vmatprep.subr.bf16.mxu0 0
    %1172 = vmatpush2.bf16.msra.mxu0 0
    %1173 = vmatprep.subr.bf16.mxu0 0
    %1174 = vmatpush2.bf16.msra.mxu0 0
    %1175 = vmatprep.subr.bf16.mxu0 0
    %1176 = vmatpush2.bf16.msra.mxu0 0
    %1177 = vmatprep.subr.bf16.mxu0 0
    %1178 = vmatpush2.bf16.msra.mxu0 0
    %1179 = vmatprep.subr.bf16.mxu0 0
    %1180 = vmatpush2.bf16.msra.mxu0 0
    %1181 = vmatprep.subr.bf16.mxu0 0
    %1182 = vmatpush2.bf16.msra.mxu0 0
    %1183 = vmatprep.mubr.bf16.mxu0 0
    %1184 = vmatmul.mubr.bf16.gmra.mxu0 %v1149
    %v1185 = vpop.f32.mrf.mxu0
    %v1186 = vadd.f32 %v1134, %v1185
    %v1187 = vpop.f32.mrf.mxu0
    %v1188 = vpop.f32.mrf.mxu0
    %v1189 = vadd.f32 %v1134, %v1188
    %v1190 = vpop.f32.mrf.mxu0
    %1191 = vdwg.mxu0
    %v1192 = vadd.f32 %v119, %v1186
    %v1193 = vadd.f32 %v120, %v1189
    %v1194 = vsel %vm145, %v1192, 0.0
    %v1195 = vrot.slane %v1194, 4
    %v1196 = vadd.f32 %v1194, %v1195
    %v1197 = vrot.slane %v1196, 2
    %v1198 = vadd.f32 %v1196, %v1197
    %v1199 = vrot.slane %v1198, 1
    %v1200 = vadd.f32 %v1198, %v1199
    %v1201 = vsel %vm145, %v1193, 0.0
    %v1202 = vrot.slane %v1201, 4
    %v1203 = vadd.f32 %v1201, %v1202
    %v1204 = vrot.slane %v1203, 2
    %v1205 = vadd.f32 %v1203, %v1204
    %v1206 = vrot.slane %v1205, 1
    %v1207 = vadd.f32 %v1205, %v1206
    %v1208 = vrcp.pop 8.0
    %v1209 = vmul.f32 %v1200, %v1208
    %v1210 = vmul.f32 %v1207, %v1208
    %v1211 = vsub.f32 %v1192, %v1209
    %v1212 = vsub.f32 %v1193, %v1210
    %v1213 = vmul.f32 %v1211, %v1211
    %v1214 = vmul.f32 %v1212, %v1212
    %v1215 = vsel %vm145, %v1213, 0.0
    %v1216 = vrot.slane %v1215, 4
    %v1217 = vadd.f32 %v1215, %v1216
    %v1218 = vrot.slane %v1217, 2
    %v1219 = vadd.f32 %v1217, %v1218
    %v1220 = vrot.slane %v1219, 1
    %v1221 = vadd.f32 %v1219, %v1220
    %v1222 = vsel %vm145, %v1214, 0.0
    %v1223 = vrot.slane %v1222, 4
    %v1224 = vadd.f32 %v1222, %v1223
    %v1225 = vrot.slane %v1224, 2
    %v1226 = vadd.f32 %v1224, %v1225
    %v1227 = vrot.slane %v1226, 1
    %v1228 = vadd.f32 %v1226, %v1227
    %v1229 = vmul.f32 %v1221, %v1208
    %v1230 = vmul.f32 %v1228, %v1208
    %v1231 = vadd.f32 %v1229, 1e-05
    %v1232 = vadd.f32 %v1230, 1e-05
    %v1233 = vrsqrt.pop %v1231
    %v1234 = vrsqrt.pop %v1232
    %v1235 = vmul.f32 %v1211, %v1233
    %v1236 = vmul.f32 %v1212, %v1234
    %v1237 = vmax.f32 %v1235, 0.0
    %v1238 = vmax.f32 %v1236, 0.0
    %v1239 = vcombine.high %v1237, 0.0
    %v1241 = vunpack.c.l.s4 1983009808
    %v1242 = vunpack.c.0.s8 %v1241
    %v1243 = vlaneseq
    %v1244 = vshrl.u32 %v1243, 7
    %v1245 = vsub.s32 %v1242, %v1244
    %v1246 = vrot.slane %v1237, %v1245
    %v1248 = vunpack.c.l.s4 1983009808
    %v1249 = vunpack.c.0.s8 %v1248
    %v1250 = vlaneseq
    %v1251 = vshrl.u32 %v1250, 7
    %v1252 = vsub.s32 %v1249, %v1251
    %v1253 = vrot.slane %v1239, %v1252
    %v1254 = vcombine.high %v1238, 0.0
    %v1256 = vunpack.c.l.s4 1983009808
    %v1257 = vunpack.c.0.s8 %v1256
    %v1258 = vlaneseq
    %v1259 = vshrl.u32 %v1258, 7
    %v1260 = vsub.s32 %v1257, %v1259
    %v1261 = vrot.slane %v1238, %v1260
    %v1263 = vunpack.c.l.s4 1983009808
    %v1264 = vunpack.c.0.s8 %v1263
    %v1265 = vlaneseq
    %v1266 = vshrl.u32 %v1265, 7
    %v1267 = vsub.s32 %v1264, %v1266
    %v1268 = vrot.slane %v1254, %v1267
    %v1269 = vcombine.low %v1246, %v1261
    %v1270 = vcombine.high %v1246, %v1261
    %v1272 = vunpack.c.l.s4 1934713408
    %v1273 = vunpack.c.0.s8 %v1272
    %v1274 = vlaneseq
    %v1275 = vshrl.u32 %v1274, 7
    %v1276 = vsub.s32 %v1273, %v1275
    %v1277 = vrot.slane %v1269, %v1276
    %v1279 = vunpack.c.l.s4 1934713408
    %v1280 = vunpack.c.0.s8 %v1279
    %v1281 = vlaneseq
    %v1282 = vshrl.u32 %v1281, 7
    %v1283 = vsub.s32 %v1280, %v1282
    %v1284 = vrot.slane %v1270, %v1283
    %v1285 = vcombine.low %v1253, %v1268
    %v1286 = vcombine.high %v1253, %v1268
    %v1288 = vunpack.c.l.s4 1934713408
    %v1289 = vunpack.c.0.s8 %v1288
    %v1290 = vlaneseq
    %v1291 = vshrl.u32 %v1290, 7
    %v1292 = vsub.s32 %v1289, %v1291
    %v1293 = vrot.slane %v1285, %v1292
    %v1295 = vunpack.c.l.s4 1934713408
    %v1296 = vunpack.c.0.s8 %v1295
    %v1297 = vlaneseq
    %v1298 = vshrl.u32 %v1297, 7
    %v1299 = vsub.s32 %v1296, %v1298
    %v1300 = vrot.slane %v1286, %v1299
    %v1301 = vcombine.high %v1277, 0.0
    %v1302 = vcombine.high %v1284, 0.0
    %v1303 = vcombine.high %v1293, 0.0
    %v1304 = vcombine.high %v1300, 0.0
    %vm1305 = vcmask 254976
    %1306 = vst.msk [vmem:[#allocation8] sm:$0x3] %vm1305, %v1277
    %1307 = vst.msk [vmem:[#allocation8 + $0x2] sm:$0x3] %vm1305, %v1301
    %1308 = vst.msk [vmem:[#allocation8 + $0x4] sm:$0x3] %vm1305, %v1284
    %1309 = vst.msk [vmem:[#allocation8 + $0x6] sm:$0x3] %vm1305, %v1302
    %1310 = vst.msk [vmem:[#allocation8 + $0x8] sm:$0x3] %vm1305, %v1293
    %1311 = vst.msk [vmem:[#allocation8 + $0xa] sm:$0x3] %vm1305, %v1303
    %1312 = vst.msk [vmem:[#allocation8 + $0xc] sm:$0x3] %vm1305, %v1300
    %1313 = vst.msk [vmem:[#allocation8 + $0xe] sm:$0x3] %vm1305, %v1304
    // Predicated region
    $region34: #{tpu_custom_call.1} parent=1 // pred_check
      _
    $region35: #{tpu_custom_call.1} parent=1 // pred_check_branch
      %1315 = sbr.rel (0) target = $region37
    $region36: #{tpu_custom_call.1} parent=1 // pred_region
      %s1317 = ssub.s32 256, 256
      %1318 = vsyncadd [#allocation4], %s1317
      %s1319 = sshll.u32 [#allocation8], 4
      %s1320 = int_to_ptr.vmem [resolvable:$true] %s1319
      %1325 = dma.vmem_to_hbm [thread:$0]  %s1320, 256, %s5, [#allocation4], 32, 32, 2
    $region37: #{tpu_custom_call.1} parent=1 // pred_fallthru
      _
    // Predicated region
    $region38: #{tpu_custom_call.1} parent=1 // pred_check
      _
    $region39: #{tpu_custom_call.1} parent=1 // pred_check_branch
      %1327 = sbr.rel (0) target = $region41
    $region40: #{tpu_custom_call.1} parent=1 // pred_region
      %1328 = dma.done [#allocation4], 256
    $region41: #{tpu_custom_call.1} parent=1 // pred_fallthru
      _
    %1329 = vsyncpa [#allocation3], 1
    %1330 = vsyncpa [#allocation6], 1
    %1331 = vsyncpa [#allocation4], 1

</llo_original>
